<compile_context>
chip_gen: v7x
topology: tpu7x:2x2x1
jax: 0.10.0
libtpu: 0.0.40
codegen_flags: <defaults>
</compile_context>

<pallas_src>
import functools
import math

import jax
import jax.numpy as jnp
from jax.experimental import pallas as pl
from jax.experimental.pallas import tpu as pltpu


def _cdiv(a, b):
    return -(-a // b)


def _round_up(n, m):
    return ((n + m - 1) // m) * m


def _sublayer_connection_kernel(x_ref, w_ref, wb_ref, a_ref, b_ref, o_ref, y_ref,
                                *, eps: float, hidden: int, hidden_p: int, tn: int):
    j = pl.program_id(1)

    # ----- LayerNorm, hoisted: computed once per row tile (j == 0), cached in
    # a bf16 VMEM scratch and reused for every weight-column slab. -----------
    @pl.when(j == 0)
    def _():
        x = x_ref[...].astype(jnp.float32)                       # (tr, Hp)
        # torch semantics: mean over the *logical* hidden dim, unbiased std,
        # eps added to std (not to var).  Padded columns of x are zero, so the
        # plain sum already equals the logical sum.
        mean = jnp.sum(x, axis=-1, keepdims=True) * (1.0 / hidden)
        diff = x - mean
        if hidden_p != hidden:                                   # mask padded cols
            col = jax.lax.broadcasted_iota(jnp.int32, diff.shape, 1)
            diff = jnp.where(col < hidden, diff, 0.0)
        var_unbiased = jnp.sum(diff * diff, axis=-1, keepdims=True) * (1.0 / (hidden - 1))
        std = jnp.sqrt(var_unbiased)
        inv = pl.reciprocal(std + eps, approx=True)              # EUP slot, frees VALU
        y = (diff * inv) * a_ref[...] + b_ref[...]               # (tr, Hp)
        y_ref[...] = y.astype(jnp.bfloat16)                      # bf16 for the MXU

    # ----- sublayer: Linear(H -> tn slab) on the MXU, bf16 in / f32 acc -----
    z = jnp.dot(y_ref[...], w_ref[...],
                preferred_element_type=jnp.float32) + wb_ref[...]   # (tr, tn)

    # ----- dropout (eval mode = identity) + residual add on matching slab ---
    # TODO(synk): training-mode dropout (pltpu.prng_seed/prng_random_bits) not wired in.
    if tn == hidden_p:
        x_res = x_ref[...]
    else:
        col0 = pl.multiple_of(j * tn, tn)
        x_res = x_ref[:, pl.ds(col0, tn)]
    o_ref[...] = (x_res.astype(jnp.float32) + z).astype(o_ref.dtype)


def _vmem_capacity_bytes():
    """Physical VMEM per TensorCore; conservative 64 MiB (v7x) fallback."""
    try:
        info = pltpu.get_tpu_info()
        for name in ("vmem_capacity_bytes", "vmem_bytes", "vmem_size_bytes"):
            v = getattr(info, name, None)
            if v:
                return int(v)
    except Exception:
        pass
    return 64 * 1024 * 1024


def _vmem_need(tile_rows, hp, tn, out_itemsize):
    """Estimated VMEM footprint, including compiler-managed LN temporaries."""
    return (2 * tile_rows * hp * 4                 # double-buffered x row tile (f32)
            + 2 * tile_rows * tn * out_itemsize    # double-buffered out tile
            + 2 * hp * tn * 2                      # double-buffered bf16 weight slab
            + tile_rows * hp * 2                   # LN-output scratch (bf16)
            + 3 * tile_rows * hp * 4               # LN temporaries (diff / y / casts)
            + 2 * tn * 4 + 4 * hp * 4              # biases / LN params
            + (1 << 20))                           # headroom


def sublayer_connection(x, w, wb, a2, b2, *, eps=1e-6):
    """x: (B, S, H) float32.  w: (H, H), wb/a2/b2: (H,).  Returns (B, S, H)."""
    B, S, H = x.shape
    rows = B * S
    out_itemsize = x.dtype.itemsize

    # ---- lane-dense hidden dim (pad to multiple of 128, slice back at end) --
    hp = _round_up(H, 128)

    vmem_cap = _vmem_capacity_bytes()
    budget = int(vmem_cap * 0.8)                   # ~20% headroom

    # ---- weight-column tiling: fully resident bf16 weight when it fits ------
    if 2 * hp * hp * 2 <= budget // 4:
        tn = hp                                    # resident: never re-streamed per row tile
    else:
        tn = 256 if hp % 256 == 0 else 128         # MXU-native lane-dense slabs

    # ---- row tile: largest fitting the VMEM budget, padding <= one tile -----
    target_rows = 8
    for cand in (512, 384, 256, 192, 128, 64, 32, 16, 8):
        if _vmem_need(cand, hp, tn, out_itemsize) <= budget:
            target_rows = cand
            break
    n_row_tiles = max(1, _cdiv(rows, target_rows))
    tile_rows = max(8, _round_up(_cdiv(rows, n_row_tiles), 8))
    rows_p = _round_up(rows, tile_rows)
    grid = (rows_p // tile_rows, hp // tn)
    grid_i = rows_p // tile_rows

    # ---- operand layout (host-side, one-time) -------------------------------
    x2 = x.reshape(rows, H)
    x2 = jnp.pad(x2, ((0, rows_p - rows), (0, hp - H)))      # zero pad rows/cols
    w_lo = jnp.pad(w, ((0, hp - H), (0, hp - H))).astype(jnp.bfloat16)
    wb2 = jnp.pad(wb, (0, hp - H)).reshape(1, hp).astype(jnp.float32)
    a2r = jnp.pad(a2, (0, hp - H)).reshape(1, hp).astype(jnp.float32)
    b2r = jnp.pad(b2, (0, hp - H)).reshape(1, hp).astype(jnp.float32)

    kernel = functools.partial(_sublayer_connection_kernel,
                               eps=eps, hidden=H, hidden_p=hp, tn=tn)

    if tn == hp:
        w_index = lambda i, j: (0, 0)              # resident: DMA skipped across all steps
    else:
        w_index = lambda i, j: (0, j)              # streamed column slabs

    vmem_limit = int(min(max(int(1.5 * _vmem_need(tile_rows, hp, tn, out_itemsize)),
                             32 * 1024 * 1024),
                         vmem_cap))

    weight_traffic = hp * hp * 2 if tn == hp else grid_i * hp * hp * 2
    cost = pl.CostEstimate(
        flops=2 * rows_p * hp * hp,
        transcendentals=2 * rows_p,                # one sqrt + one reciprocal per row
        bytes_accessed=(rows_p * hp * 4            # x read
                        + rows_p * hp * out_itemsize   # out write
                        + weight_traffic
                        + 4 * hp * 4),
    )

    out = pl.pallas_call(
        kernel,
        out_shape=jax.ShapeDtypeStruct((rows_p, hp), x.dtype),
        grid_spec=pltpu.PrefetchScalarGridSpec(
            num_scalar_prefetch=0,
            grid=grid,
            in_specs=[
                pl.BlockSpec((tile_rows, hp), lambda i, j: (i, 0)),  # x row tile (resident over j)
                pl.BlockSpec((hp, tn), w_index),                     # bf16 weight slab
                pl.BlockSpec((1, tn), lambda i, j: (0, j)),          # linear bias slab
                pl.BlockSpec((1, hp), lambda i, j: (0, 0)),          # a_2 (LN scale)
                pl.BlockSpec((1, hp), lambda i, j: (0, 0)),          # b_2 (LN shift)
            ],
            out_specs=pl.BlockSpec((tile_rows, tn), lambda i, j: (i, j)),
            scratch_shapes=[pltpu.VMEM((tile_rows, hp), jnp.bfloat16)],  # hoisted LN output
        ),
        compiler_params=pltpu.CompilerParams(
            dimension_semantics=("parallel", "arbitrary"),   # scratch carries across j
            vmem_limit_bytes=vmem_limit,
        ),
        cost_estimate=cost,
    )(x2, w_lo, wb2, a2r, b2r)

    return out[:rows, :H].reshape(B, S, H)


def _reference(x, w, wb, a2, b2, eps=1e-6):
    """Pure-JAX f32 reference mirroring the PyTorch module."""
    mean = jnp.mean(x, axis=-1, keepdims=True)
    var = jnp.sum((x - mean) ** 2, axis=-1, keepdims=True) / (x.shape[-1] - 1)
    std = jnp.sqrt(var)
    y = a2 * (x - mean) / (std + eps) + b2
    z = y @ w + wb
    return x + z


if __name__ == "__main__":
    B, S, H = 2, 8, 32                     # batch=2, seq=8, hidden=32
    key = jax.random.PRNGKey(0)
    kx, kw, kb = jax.random.split(key, 3)

    x = jax.random.normal(kx, (B, S, H), dtype=jnp.float32)

    # Deterministic sublayer (Linear) parameters.
    w = jax.random.normal(kw, (H, H), dtype=jnp.float32) * (1.0 / math.sqrt(H))
    wb = jax.random.normal(kb, (H,), dtype=jnp.float32) * 0.01

    # LayerNorm parameters as in __init__: ones / zeros.
    a2 = jnp.ones((H,), dtype=jnp.float32)
    b2 = jnp.zeros((H,), dtype=jnp.float32)

    out = sublayer_connection(x, w, wb, a2, b2)
    out = jax.block_until_ready(out)

    ref = _reference(x, w, wb, a2, b2)
    assert out.shape == (B, S, H)
    # bf16 MXU operands + approximate EUP reciprocal => loosened tolerance vs
    # the pure-f32 reference (accumulation stays f32).
    assert jnp.allclose(out, ref, atol=3e-2, rtol=3e-2), "mismatch vs reference"

    print("KERNEL_OK")
</pallas_src>

<mosaic_0001>
module attributes {stable_mosaic.version = 11 : i64} {
  func.func @_sublayer_connection_kernel(%arg0: i32, %arg1: i32, %arg2: memref<16x128xf32, #tpu.memory_space<vmem>>, %arg3: memref<128x128xbf16, #tpu.memory_space<vmem>>, %arg4: memref<1x128xf32, #tpu.memory_space<vmem>>, %arg5: memref<1x128xf32, #tpu.memory_space<vmem>>, %arg6: memref<1x128xf32, #tpu.memory_space<vmem>>, %arg7: memref<16x128xf32, #tpu.memory_space<vmem>>, %arg8: memref<16x128xbf16, #tpu.memory_space<vmem>>) attributes {dimension_semantics = [#tpu.dimension_semantics<parallel>, #tpu.dimension_semantics<arbitrary>], iteration_bounds = array<i64: 1, 1>, scalar_prefetch = 0 : i64, scratch_operands = 1 : i64, tpu.core_type = #tpu.core_type<tc>, window_params = [{transform_indices = @transform_0, window_bounds = array<i64: 16, 128>}, {pipeline_mode = #tpu.pipeline_mode<synchronous>, transform_indices = @transform_1, window_bounds = array<i64: 128, 128>}, {transform_indices = @transform_2, window_bounds = array<i64: 1, 128>}, {pipeline_mode = #tpu.pipeline_mode<synchronous>, transform_indices = @transform_3, window_bounds = array<i64: 1, 128>}, {pipeline_mode = #tpu.pipeline_mode<synchronous>, transform_indices = @transform_4, window_bounds = array<i64: 1, 128>}, {transform_indices = @transform_5, window_bounds = array<i64: 16, 128>}]} {
    %c0_i32 = arith.constant 0 : i32
    %0 = arith.cmpi eq, %arg1, %c0_i32 : i32
    %1 = arith.extui %0 : i1 to i32
    %c0_i32_0 = arith.constant 0 : i32
    %2 = arith.cmpi ne, %1, %c0_i32_0 : i32
    scf.if %2 {
      %c0_10 = arith.constant 0 : index
      %c0_11 = arith.constant 0 : index
      %12 = vector.load %arg2[%c0_10, %c0_11] : memref<16x128xf32, #tpu.memory_space<vmem>>, vector<16x128xf32>
      %cst_12 = arith.constant dense<0.000000e+00> : vector<16xf32>
      %13 = vector.multi_reduction <add>, %12, %cst_12 [1] : vector<16x128xf32> to vector<16xf32>
      %14 = vector.shape_cast %13 : vector<16xf32> to vector<16x1xf32>
      %cst_13 = arith.constant 3.125000e-02 : f32
      %15 = vector.broadcast %cst_13 : f32 to vector<16x1xf32>
      %16 = arith.mulf %14, %15 : vector<16x1xf32>
      %17 = vector.broadcast %16 : vector<16x1xf32> to vector<16x128xf32>
      %18 = arith.subf %12, %17 : vector<16x128xf32>
      %19 = tpu.iota {dimensions = array<i32: 1>} : vector<16x128xi32>
      %c32_i32 = arith.constant 32 : i32
      %20 = vector.broadcast %c32_i32 : i32 to vector<16x128xi32>
      %21 = arith.cmpi slt, %19, %20 : vector<16x128xi32>
      %cst_14 = arith.constant 0.000000e+00 : f32
      %22 = vector.broadcast %cst_14 : f32 to vector<16x128xf32>
      %23 = arith.select %21, %18, %22 : vector<16x128xi1>, vector<16x128xf32>
      %24 = arith.mulf %23, %23 : vector<16x128xf32>
      %cst_15 = arith.constant dense<0.000000e+00> : vector<16xf32>
      %25 = vector.multi_reduction <add>, %24, %cst_15 [1] : vector<16x128xf32> to vector<16xf32>
      %26 = vector.shape_cast %25 : vector<16xf32> to vector<16x1xf32>
      %cst_16 = arith.constant 0.0322580636 : f32
      %27 = vector.broadcast %cst_16 : f32 to vector<16x1xf32>
      %28 = arith.mulf %26, %27 : vector<16x1xf32>
      %29 = math.sqrt %28 : vector<16x1xf32>
      %cst_17 = arith.constant 9.99999997E-7 : f32
      %30 = vector.broadcast %cst_17 : f32 to vector<16x1xf32>
      %31 = arith.addf %29, %30 : vector<16x1xf32>
      %32 = tpu.reciprocal %31 {approx = true} : vector<16x1xf32> -> vector<16x1xf32>
      %33 = vector.broadcast %32 : vector<16x1xf32> to vector<16x128xf32>
      %34 = arith.mulf %23, %33 : vector<16x128xf32>
      %c0_18 = arith.constant 0 : index
      %c0_19 = arith.constant 0 : index
      %35 = vector.load %arg5[%c0_18, %c0_19] : memref<1x128xf32, #tpu.memory_space<vmem>>, vector<1x128xf32>
      %36 = vector.broadcast %35 : vector<1x128xf32> to vector<16x128xf32>
      %37 = arith.mulf %34, %36 : vector<16x128xf32>
      %c0_20 = arith.constant 0 : index
      %c0_21 = arith.constant 0 : index
      %38 = vector.load %arg6[%c0_20, %c0_21] : memref<1x128xf32, #tpu.memory_space<vmem>>, vector<1x128xf32>
      %39 = vector.broadcast %38 : vector<1x128xf32> to vector<16x128xf32>
      %40 = arith.addf %37, %39 : vector<16x128xf32>
      %41 = arith.truncf %40 : vector<16x128xf32> to vector<16x128xbf16>
      %c0_22 = arith.constant 0 : index
      %c0_23 = arith.constant 0 : index
      %42 = vector.load %arg8[%c0_22, %c0_23] : memref<16x128xbf16, #tpu.memory_space<vmem>>, vector<16x128xbf16>
      tpu.vector_store %arg8[%c0_22, %c0_23], %41 {strides = array<i32>} : memref<16x128xbf16, #tpu.memory_space<vmem>>, vector<16x128xbf16>,
    } else {
    }
    %c0 = arith.constant 0 : index
    %c0_1 = arith.constant 0 : index
    %3 = vector.load %arg8[%c0, %c0_1] : memref<16x128xbf16, #tpu.memory_space<vmem>>, vector<16x128xbf16>
    %c0_2 = arith.constant 0 : index
    %c0_3 = arith.constant 0 : index
    %4 = vector.load %arg3[%c0_2, %c0_3] : memref<128x128xbf16, #tpu.memory_space<vmem>>, vector<128x128xbf16>
    %cst = arith.constant dense<0.000000e+00> : vector<16x128xf32>
    %5 = tpu.matmul %3, %4, %cst {dimension_numbers = #tpu.dot_dimension_numbers<[1], [0], [0], [1], [0, 0, 1, 1], [], []>} : vector<16x128xbf16>, vector<128x128xbf16>, vector<16x128xf32> -> vector<16x128xf32>
    %c0_4 = arith.constant 0 : index
    %c0_5 = arith.constant 0 : index
    %6 = vector.load %arg4[%c0_4, %c0_5] : memref<1x128xf32, #tpu.memory_space<vmem>>, vector<1x128xf32>
    %7 = vector.broadcast %6 : vector<1x128xf32> to vector<16x128xf32>
    %8 = arith.addf %5, %7 : vector<16x128xf32>
    %c0_6 = arith.constant 0 : index
    %c0_7 = arith.constant 0 : index
    %9 = vector.load %arg2[%c0_6, %c0_7] : memref<16x128xf32, #tpu.memory_space<vmem>>, vector<16x128xf32>
    %10 = arith.addf %9, %8 : vector<16x128xf32>
    %c0_8 = arith.constant 0 : index
    %c0_9 = arith.constant 0 : index
    %11 = vector.load %arg7[%c0_8, %c0_9] : memref<16x128xf32, #tpu.memory_space<vmem>>, vector<16x128xf32>
    tpu.vector_store %arg7[%c0_8, %c0_9], %10 {strides = array<i32>} : memref<16x128xf32, #tpu.memory_space<vmem>>, vector<16x128xf32>,
    return
  }
  func.func @transform_0(%arg0: i32, %arg1: i32) -> (i32, i32) {
    %c0_i32 = arith.constant 0 : i32
    %c0_i32_0 = arith.constant 0 : i32
    return %arg0, %c0_i32 : i32, i32
  }
  func.func @transform_1(%arg0: i32, %arg1: i32) -> (i32, i32) {
    %c0_i32 = arith.constant 0 : i32
    %c0_i32_0 = arith.constant 0 : i32
    %c0_i32_1 = arith.constant 0 : i32
    return %c0_i32, %c0_i32_0 : i32, i32
  }
  func.func @transform_2(%arg0: i32, %arg1: i32) -> (i32, i32) {
    %c0_i32 = arith.constant 0 : i32
    %c0_i32_0 = arith.constant 0 : i32
    return %c0_i32, %arg1 : i32, i32
  }
  func.func @transform_3(%arg0: i32, %arg1: i32) -> (i32, i32) {
    %c0_i32 = arith.constant 0 : i32
    %c0_i32_0 = arith.constant 0 : i32
    %c0_i32_1 = arith.constant 0 : i32
    return %c0_i32, %c0_i32_0 : i32, i32
  }
  func.func @transform_4(%arg0: i32, %arg1: i32) -> (i32, i32) {
    %c0_i32 = arith.constant 0 : i32
    %c0_i32_0 = arith.constant 0 : i32
    %c0_i32_1 = arith.constant 0 : i32
    return %c0_i32, %c0_i32_0 : i32, i32
  }
  func.func @transform_5(%arg0: i32, %arg1: i32) -> (i32, i32) {
    %c0_i32 = arith.constant 0 : i32
    return %arg0, %arg1 : i32, i32
  }
}

</mosaic_0001>

<llo_original>
// kernel: tpu_custom_call.1
$region0: #{tpu_custom_call.1}
  #allocation0 [shape = 'u32[]', space=smem, size = 0x4, offset = 0x4, fixed_abs, tag = 'smem constant byte address 0x4 - core index']
  #allocation1 [shape = 'u32[144,128]{1,0:T(1,128)}', space=vmem, size = 0x12000, scoped, tag = 'internal scratch']
  #allocation2 [shape = 'bf16[16,128]{1,0:T(16,128)(2,1)}', space=vmem, size = 0x1000, scoped, tag = 'scratch operand']
  %s0 = inlined_call_operand.hbm [shape: f32[16,128], index: 0, kind: input, shape index: {}]
  %s1 = inlined_call_operand.hbm [shape: bf16[128,128], index: 1, kind: input, shape index: {}]
  %s2 = inlined_call_operand.vmem [shape: f32[1,128], index: 2, kind: input, shape index: {}]
  %s3 = inlined_call_operand.vmem [shape: f32[1,128], index: 3, kind: input, shape index: {}]
  %s4 = inlined_call_operand.vmem [shape: f32[1,128], index: 4, kind: input, shape index: {}]
  %s5 = inlined_call_operand.hbm [shape: f32[16,128], index: 5, kind: output, shape index: {}]
  %s6 = sld [smem:[#allocation0]]
  $region42: #{tpu_custom_call.1} parent=0
    _
  %s8 = ssub.s32 1, %s6
  %s9 = scalar_select 0, %s8, %s6
  $region1: #{tpu_custom_call.1} parent=0
    #allocation3 [shape = 'u8[8192]{0}', space=vmem, size = 0x2000, scoped, tag = 'input window, operand 0, single buffered']
    #allocation4 [shape = 's32[1]{0}', space=sflag, size = 0x4, scoped, tag = 'scoped memory for tpu_custom_call.1']
    #allocation5 [shape = 's32[1]{0}', space=sflag, size = 0x4, scoped, tag = 'scoped memory for tpu_custom_call.1']
    #allocation6 [shape = 'u8[32768]{0}', space=vmem, size = 0x8000, scoped, tag = 'input window, operand 1, single buffered']
    #allocation7 [shape = 's32[1]{0}', space=sflag, size = 0x4, scoped, tag = 'scoped memory for tpu_custom_call.1']
    #allocation8 [shape = 'u8[8192]{0}', space=vmem, size = 0x2000, scoped, tag = 'output window, operand 0, single buffered']
    %10 = vsyncpa [#allocation4], 0
    %11 = vsyncpa [#allocation7], 0
    %12 = vsyncpa [#allocation5], 0
    // Predicated region
    $region2: #{tpu_custom_call.1} parent=1 // pred_check
      _
    $region3: #{tpu_custom_call.1} parent=1 // pred_check_branch
      %14 = sbr.rel (0) target = $region5
    $region4: #{tpu_custom_call.1} parent=1 // pred_region
      %s16 = ssub.s32 256, 256
      %17 = vsyncadd [#allocation4], %s16
      %s18 = sshll.u32 [#allocation3], 4
      %s19 = int_to_ptr.vmem [resolvable:$true] %s18
      %24 = dma.hbm_to_vmem [thread:$0]  %s0, 256, %s19, [#allocation4], 128, 128, 8
    $region5: #{tpu_custom_call.1} parent=1 // pred_fallthru
      _
    // Predicated region
    $region6: #{tpu_custom_call.1} parent=1 // pred_check
      _
    $region7: #{tpu_custom_call.1} parent=1 // pred_check_branch
      %26 = sbr.rel (0) target = $region9
    $region8: #{tpu_custom_call.1} parent=1 // pred_region
      %s28 = ssub.s32 1024, 1024
      %29 = vsyncadd [#allocation7], %s28
      %s30 = sshll.u32 [#allocation6], 4
      %s31 = int_to_ptr.vmem [resolvable:$true] %s30
      %36 = dma.hbm_to_vmem [thread:$0]  %s1, 1024, %s31, [#allocation7], 64, 64, 4
    $region9: #{tpu_custom_call.1} parent=1 // pred_fallthru
      _
    // Predicated region
    $region10: #{tpu_custom_call.1} parent=1 // pred_check
      _
    $region11: #{tpu_custom_call.1} parent=1 // pred_check_branch
      %38 = sbr.rel (0) target = $region13
    $region12: #{tpu_custom_call.1} parent=1 // pred_region
      _
    $region13: #{tpu_custom_call.1} parent=1 // pred_fallthru
      _
    // Predicated region
    $region14: #{tpu_custom_call.1} parent=1 // pred_check
      _
    $region15: #{tpu_custom_call.1} parent=1 // pred_check_branch
      %40 = sbr.rel (0) target = $region17
    $region16: #{tpu_custom_call.1} parent=1 // pred_region
      _
    $region17: #{tpu_custom_call.1} parent=1 // pred_fallthru
      _
    // Predicated region
    $region18: #{tpu_custom_call.1} parent=1 // pred_check
      _
    $region19: #{tpu_custom_call.1} parent=1 // pred_check_branch
      %42 = sbr.rel (0) target = $region21
    $region20: #{tpu_custom_call.1} parent=1 // pred_region
      _
    $region21: #{tpu_custom_call.1} parent=1 // pred_fallthru
      _
    // Predicated region
    $region22: #{tpu_custom_call.1} parent=1 // pred_check
      _
    $region23: #{tpu_custom_call.1} parent=1 // pred_check_branch
      %44 = sbr.rel (0) target = $region25
    $region24: #{tpu_custom_call.1} parent=1 // pred_region
      %45 = dma.done [#allocation4], 256
    $region25: #{tpu_custom_call.1} parent=1 // pred_fallthru
      _
    // Predicated region
    $region26: #{tpu_custom_call.1} parent=1 // pred_check
      _
    $region27: #{tpu_custom_call.1} parent=1 // pred_check_branch
      %47 = sbr.rel (0) target = $region29
    $region28: #{tpu_custom_call.1} parent=1 // pred_region
      %48 = dma.done [#allocation7], 1024
    $region29: #{tpu_custom_call.1} parent=1 // pred_fallthru
      _
    %p50 = scmp.eq.s32.totalorder 0, 0
    // Predicated region
    $region30: #{tpu_custom_call.1} parent=1 // pred_check
      %p51 = pneg %p50
    $region31: #{tpu_custom_call.1} parent=1 // pred_check_branch
      %53 = sbr.rel (%p51) target = $region33
    $region32: #{tpu_custom_call.1} parent=1 // pred_region
      %v54 = vld [vmem:[#allocation3] sm:$0xff]
      %v55 = vld [vmem:[#allocation3 + $0x8] sm:$0xff]
      %56 = vadd.xlane.f32.xlu0 %v54
      %v57 = vpop.xlane.xlu0 %56
      %58 = vadd.xlane.f32.xlu0 %v55
      %v59 = vpop.xlane.xlu0 %58
      %v60 = vmul.f32 %v57, 0.03125
      %v61 = vmul.f32 %v59, 0.03125
      %v62 = vsub.f32 %v54, %v60
      %v63 = vsub.f32 %v55, %v61
      %v64 = vlaneseq
      %v65 = vand.u32 %v64, 127
      %vm66 = vcmp.lt.s32.totalorder %v65, 32
      %v67 = vsel %vm66, %v62, 0.0
      %v68 = vsel %vm66, %v63, 0.0
      %v69 = vmul.f32 %v67, %v67
      %v70 = vmul.f32 %v68, %v68
      %71 = vadd.xlane.f32.xlu0 %v69
      %v72 = vpop.xlane.xlu0 %71
      %73 = vadd.xlane.f32.xlu0 %v70
      %v74 = vpop.xlane.xlu0 %73
      %v75 = vmul.f32 %v72, 0.032258064
      %v76 = vmul.f32 %v74, 0.032258064
      %v77 = vrsqrt.pop %v75
      %v78 = vmul.f32 %v75, %v77
      %vm79 = vcmp.eq.f32.partialorder %v75, inf
      %v80 = vsel %vm79, %v75, %v78
      %vm81 = vcmp.eq.f32.partialorder %v75, 0.0
      %v82 = vand.u32 %v75, 2147483648
      %v83 = vsel %vm81, %v82, %v80
      %v84 = vrsqrt.pop %v76
      %v85 = vmul.f32 %v76, %v84
      %vm86 = vcmp.eq.f32.partialorder %v76, inf
      %v87 = vsel %vm86, %v76, %v85
      %vm88 = vcmp.eq.f32.partialorder %v76, 0.0
      %v89 = vand.u32 %v76, 2147483648
      %v90 = vsel %vm88, %v89, %v87
      %v91 = vadd.f32 %v83, 1e-06
      %v92 = vadd.f32 %v90, 1e-06
      %v93 = vrcp.pop %v91
      %v94 = vrcp.pop %v92
      %v95 = vmul.f32 %v67, %v93
      %v96 = vmul.f32 %v68, %v94
      %v97 = vld [vmem:[%s3] sm:$0x1]
      %v99 = vlaneseq
      %v100 = vshrl.u32 %v99, 7
      %v101 = vsub.s32 0, %v100
      %v102 = vrot.slane %v97, %v101
      %v104 = vmul.f32 %v95, %v102
      %v105 = vmul.f32 %v96, %v102
      %v106 = vld [vmem:[%s4] sm:$0x1]
      %v108 = vlaneseq
      %v109 = vshrl.u32 %v108, 7
      %v110 = vsub.s32 0, %v109
      %v111 = vrot.slane %v106, %v110
      %v113 = vadd.f32 %v104, %v111
      %v114 = vadd.f32 %v105, %v111
      %v115 = vpack.c.bf16 %v114, %v113
      %116 = vst [vmem:[#allocation2] sm:$0xff] %v115
    $region33: #{tpu_custom_call.1} parent=1 // pred_fallthru
      _
    %v117 = vld [vmem:[#allocation2] sm:$0xff]
    %v118 = vld [vmem:[#allocation6] sm:$0xf]
    %v119 = vld [vmem:[#allocation6 + $0x4] sm:$0xf]
    %v120 = vld [vmem:[#allocation6 + $0x8] sm:$0xf]
    %v121 = vld [vmem:[#allocation6 + $0xc] sm:$0xf]
    %v122 = vld [vmem:[#allocation6 + $0x10] sm:$0xf]
    %v123 = vld [vmem:[#allocation6 + $0x14] sm:$0xf]
    %v124 = vld [vmem:[#allocation6 + $0x18] sm:$0xf]
    %v125 = vld [vmem:[#allocation6 + $0x1c] sm:$0xf]
    %v126 = vld [vmem:[#allocation6 + $0x20] sm:$0xf]
    %v127 = vld [vmem:[#allocation6 + $0x24] sm:$0xf]
    %v128 = vld [vmem:[#allocation6 + $0x28] sm:$0xf]
    %v129 = vld [vmem:[#allocation6 + $0x2c] sm:$0xf]
    %v130 = vld [vmem:[#allocation6 + $0x30] sm:$0xf]
    %v131 = vld [vmem:[#allocation6 + $0x34] sm:$0xf]
    %v132 = vld [vmem:[#allocation6 + $0x38] sm:$0xf]
    %v133 = vld [vmem:[#allocation6 + $0x3c] sm:$0xf]
    %v134 = vld [vmem:[%s2] sm:$0x1]
    %v136 = vlaneseq
    %v137 = vshrl.u32 %v136, 7
    %v138 = vsub.s32 0, %v137
    %v139 = vrot.slane %v134, %v138
    %v157 = vunpack.c.l.b16 %v118
    %v158 = vunpack.c.l.b16 %v119
    %v159 = vunpack.c.l.b16 %v120
    %v160 = vunpack.c.l.b16 %v121
    %v161 = vunpack.c.l.b16 %v122
    %v162 = vunpack.c.l.b16 %v123
    %v163 = vunpack.c.l.b16 %v124
    %v164 = vunpack.c.l.b16 %v125
    %v165 = vunpack.c.l.b16 %v126
    %v166 = vunpack.c.l.b16 %v127
    %v167 = vunpack.c.l.b16 %v128
    %v168 = vunpack.c.l.b16 %v129
    %v169 = vunpack.c.l.b16 %v130
    %v170 = vunpack.c.l.b16 %v131
    %v171 = vunpack.c.l.b16 %v132
    %v172 = vunpack.c.l.b16 %v133
    %v173 = vpack.c.b16 %v158, %v157
    %v174 = vpack.c.b16 %v160, %v159
    %v175 = vpack.c.b16 %v162, %v161
    %v176 = vpack.c.b16 %v164, %v163
    %v177 = vpack.c.b16 %v166, %v165
    %v178 = vpack.c.b16 %v168, %v167
    %v179 = vpack.c.b16 %v170, %v169
    %v180 = vpack.c.b16 %v172, %v171
    %189 = vmatprep.subr.bf16.mxu0 0
    %190 = vmatpush1.bf16.msra.mxu0 %v173
    %191 = vmatprep.subr.bf16.mxu0 0
    %192 = vmatpush1.bf16.msra.mxu0 %v174
    %193 = vmatprep.subr.bf16.mxu0 0
    %194 = vmatpush1.bf16.msra.mxu0 %v175
    %195 = vmatprep.subr.bf16.mxu0 0
    %196 = vmatpush1.bf16.msra.mxu0 %v176
    %197 = vmatprep.subr.bf16.mxu0 0
    %198 = vmatpush1.bf16.msra.mxu0 %v177
    %199 = vmatprep.subr.bf16.mxu0 0
    %200 = vmatpush1.bf16.msra.mxu0 %v178
    %201 = vmatprep.subr.bf16.mxu0 0
    %202 = vmatpush1.bf16.msra.mxu0 %v179
    %203 = vmatprep.subr.bf16.mxu0 0
    %204 = vmatpush1.bf16.msra.mxu0 %v180
    %205 = vmatprep.subr.bf16.mxu0 0
    %206 = vmatpush1.bf16.msra.mxu0 0
    %207 = vmatprep.subr.bf16.mxu0 0
    %208 = vmatpush1.bf16.msra.mxu0 0
    %209 = vmatprep.subr.bf16.mxu0 0
    %210 = vmatpush1.bf16.msra.mxu0 0
    %211 = vmatprep.subr.bf16.mxu0 0
    %212 = vmatpush1.bf16.msra.mxu0 0
    %213 = vmatprep.subr.bf16.mxu0 0
    %214 = vmatpush1.bf16.msra.mxu0 0
    %215 = vmatprep.subr.bf16.mxu0 0
    %216 = vmatpush1.bf16.msra.mxu0 0
    %217 = vmatprep.subr.bf16.mxu0 0
    %218 = vmatpush1.bf16.msra.mxu0 0
    %219 = vmatprep.subr.bf16.mxu0 0
    %220 = vmatpush1.bf16.msra.mxu0 0
    %221 = vmatprep.mubr.bf16.mxu0 0
    %222 = vmatmul.mubr.bf16.gmra.mrb[0].mxu0 %v117
    %v223 = vpop.f32.mrb[0].mxu0
    %v224 = vadd.f32 %v139, %v223
    %v225 = vpop.f32.mrb[0].mxu0
    %v226 = vpop.f32.mrb[0].mxu0
    %v227 = vadd.f32 %v139, %v226
    %v228 = vpop.f32.mrb[0].mxu0
    %229 = vdwg.mxu0
    %v230 = vld [vmem:[#allocation3] sm:$0xff]
    %v231 = vld [vmem:[#allocation3 + $0x8] sm:$0xff]
    %v232 = vadd.f32 %v230, %v224
    %v233 = vadd.f32 %v231, %v227
    %234 = vst [vmem:[#allocation8] sm:$0xff] %v232
    %235 = vst [vmem:[#allocation8 + $0x8] sm:$0xff] %v233
    // Predicated region
    $region34: #{tpu_custom_call.1} parent=1 // pred_check
      _
    $region35: #{tpu_custom_call.1} parent=1 // pred_check_branch
      %237 = sbr.rel (0) target = $region37
    $region36: #{tpu_custom_call.1} parent=1 // pred_region
      %s239 = ssub.s32 256, 256
      %240 = vsyncadd [#allocation5], %s239
      %s241 = sshll.u32 [#allocation8], 4
      %s242 = int_to_ptr.vmem [resolvable:$true] %s241
      %247 = dma.vmem_to_hbm [thread:$0]  %s242, 256, %s5, [#allocation5], 128, 128, 8
    $region37: #{tpu_custom_call.1} parent=1 // pred_fallthru
      _
    // Predicated region
    $region38: #{tpu_custom_call.1} parent=1 // pred_check
      _
    $region39: #{tpu_custom_call.1} parent=1 // pred_check_branch
      %249 = sbr.rel (0) target = $region41
    $region40: #{tpu_custom_call.1} parent=1 // pred_region
      %250 = dma.done [#allocation5], 256
    $region41: #{tpu_custom_call.1} parent=1 // pred_fallthru
      _
    %251 = vsyncpa [#allocation4], 1
    %252 = vsyncpa [#allocation7], 1
    %253 = vsyncpa [#allocation5], 1

</llo_original>
